<compile_context>
chip_gen: v7x
topology: tpu7x:2x2x1
jax: 0.10.0
libtpu: 0.0.40
codegen_flags: <defaults>
</compile_context>

<pallas_src>
import functools

import jax
import jax.numpy as jnp
from jax import lax
from jax.experimental import pallas as pl
from jax.experimental.pallas import tpu as pltpu

LANE = 128


def _round_up(v, m):
    return (v + m - 1) // m * m


def _pad2(a, rows, cols):
    return jnp.pad(a, ((0, rows - a.shape[0]), (0, cols - a.shape[1])))


# ---------------------------------------------------------------------------
# Kernel 1: prop path (3-layer MLP fused with per-graph segment sum/mean)
# ---------------------------------------------------------------------------
def _prop_kernel(bidx_ref, x_ref, w1_ref, b1_ref, w2_ref, b2_ref, w3_ref,
                 out_ref, cnt_ref, *, is_extensive, compute_dtype, approx_recip):
    i = pl.program_id(0)
    nb = pl.num_programs(0)

    @pl.when(i == 0)
    def _init():
        out_ref[...] = jnp.zeros_like(out_ref)
        cnt_ref[...] = jnp.zeros_like(cnt_ref)

    # out_lin: Dense -> SiLU -> Dense -> SiLU -> Dense(no bias), f32 accumulation
    x = x_ref[...]                                                    # (TN, E)
    h = jnp.dot(x, w1_ref[...], preferred_element_type=jnp.float32) + b1_ref[...]
    h = jax.nn.silu(h)
    h = jnp.dot(h.astype(compute_dtype), w2_ref[...],
                preferred_element_type=jnp.float32) + b2_ref[...]
    h = jax.nn.silu(h)
    prop = jnp.dot(h.astype(compute_dtype), w3_ref[...],
                   preferred_element_type=jnp.float32)                # (TN, Op)

    # segment reduction over batch_idx for this node tile (one-hot is only B x TN).
    # Padded rows carry batch_idx == B (out of range) -> never match -> dropped.
    B = out_ref.shape[0]
    TN = x_ref.shape[0]
    iota = lax.broadcasted_iota(jnp.int32, (B, TN), 0)
    onehot = (iota == bidx_ref[...]).astype(jnp.float32)              # (B, TN)
    out_ref[...] += jnp.dot(onehot, prop, preferred_element_type=jnp.float32)

    if not is_extensive:
        cnt_ref[...] += jnp.sum(onehot, axis=1, keepdims=True)

        @pl.when(i == nb - 1)
        def _finalize():
            inv = pl.reciprocal(jnp.maximum(cnt_ref[...], 1.0), approx=approx_recip)
            out_ref[...] *= inv


# ---------------------------------------------------------------------------
# Kernel 2: direct-force path (gather, force MLP, scale by edge_vec, scatter)
# ---------------------------------------------------------------------------
def _force_kernel(idx_s_ref, idx_t_ref,            # scalar prefetch (SMEM)
                  x_ref, ev_ref,
                  w1a_ref, w1b_ref, b1_ref, w2_ref, b2_ref, w3_ref,
                  out_ref,
                  xs_buf, xt_buf, fst_buf, *, compute_dtype):
    m = pl.program_id(0)
    TM = ev_ref.shape[0]
    base = m * TM

    @pl.when(m == 0)
    def _init():
        out_ref[...] = jnp.zeros_like(out_ref)

    # ---- gather x[idx_s], x[idx_t] for this edge tile from resident VMEM x ----
    def gather_body(e, carry):
        s = idx_s_ref[base + e]
        t = idx_t_ref[base + e]
        xs_buf[pl.ds(e, 1), :] = x_ref[pl.ds(s, 1), :]
        xt_buf[pl.ds(e, 1), :] = x_ref[pl.ds(t, 1), :]
        return carry

    lax.fori_loop(0, TM, gather_body, 0)

    # ---- force MLP: concat eliminated by splitting the first weight ----------
    xs = xs_buf[...].astype(compute_dtype)
    xt = xt_buf[...].astype(compute_dtype)
    h = (jnp.dot(xs, w1a_ref[...], preferred_element_type=jnp.float32)
         + jnp.dot(xt, w1b_ref[...], preferred_element_type=jnp.float32)
         + b1_ref[...])
    h = jax.nn.silu(h)
    h = jnp.dot(h.astype(compute_dtype), w2_ref[...],
                preferred_element_type=jnp.float32) + b2_ref[...]
    h = jax.nn.silu(h)
    # tiny (H -> 1) projection on the VPU/XLU instead of a 1-live-lane MXU call
    f_mag = jnp.sum(h * w3_ref[...].astype(jnp.float32), axis=-1, keepdims=True)
    fst_buf[...] = f_mag * ev_ref[...]                                # (TM, 128)

    # ---- scatter-add force_st to nodes (padded edges have zero edge_vec) ------
    def scatter_body(e, carry):
        s = idx_s_ref[base + e]
        out_ref[pl.ds(s, 1), :] = out_ref[pl.ds(s, 1), :] + fst_buf[pl.ds(e, 1), :]
        return carry

    lax.fori_loop(0, TM, scatter_body, 0)


# ---------------------------------------------------------------------------
# Wrapper (parameter setup / pallas_call glue)
# ---------------------------------------------------------------------------
class LCAOOutPallas:
    def __init__(self, emb_size, out_size, is_extensive=True,
                 regress_forces=False, direct_forces=True,
                 key=None, compute_dtype=jnp.float32,
                 tile_n=256, tile_m=256):
        if key is None:
            key = jax.random.PRNGKey(0)
        self.emb_size = emb_size
        self.out_size = out_size
        self.is_extensive = is_extensive
        self.regress_forces = regress_forces
        self.direct_forces = direct_forces
        self.compute_dtype = compute_dtype
        self.tile_n = max(LANE, _round_up(tile_n, LANE))
        self.tile_m = max(LANE, _round_up(tile_m, LANE))
        self._itemsize = 2 if compute_dtype == jnp.bfloat16 else 4

        E, H, O = emb_size, emb_size // 2, out_size
        self.E1p = _round_up(E, LANE)
        self.Hp = _round_up(max(H, 1), LANE)
        self.Op = _round_up(O, LANE)

        ks = jax.random.split(key, 10)
        s = 0.1
        # raw (reference) params, identical affine semantics to nn.Linear
        self.w1 = s * jax.random.normal(ks[0], (E, E), jnp.float32)
        self.b1 = s * jax.random.normal(ks[1], (1, E), jnp.float32)
        self.w2 = s * jax.random.normal(ks[2], (E, H), jnp.float32)
        self.b2 = s * jax.random.normal(ks[3], (1, H), jnp.float32)
        self.w3 = s * jax.random.normal(ks[4], (H, O), jnp.float32)

        cd = compute_dtype
        # lane-padded (zero-padded) copies for the kernels
        self.w1p = _pad2(self.w1, E, self.E1p).astype(cd)
        self.b1p = _pad2(self.b1, 1, self.E1p)                 # biases stay f32
        self.w2p = _pad2(self.w2, self.E1p, self.Hp).astype(cd)
        self.b2p = _pad2(self.b2, 1, self.Hp)
        self.w3p = _pad2(self.w3, self.Hp, self.Op).astype(cd)

        if regress_forces and direct_forces:
            self.fw1 = s * jax.random.normal(ks[5], (2 * E, E), jnp.float32)
            self.fb1 = s * jax.random.normal(ks[6], (1, E), jnp.float32)
            self.fw2 = s * jax.random.normal(ks[7], (E, H), jnp.float32)
            self.fb2 = s * jax.random.normal(ks[8], (1, H), jnp.float32)
            self.fw3 = s * jax.random.normal(ks[9], (H, 1), jnp.float32)
            # split (2E, E) first force dense so the kernel avoids the (M, 2E) concat
            self.fw1ap = _pad2(self.fw1[:E], E, self.E1p).astype(cd)
            self.fw1bp = _pad2(self.fw1[E:], E, self.E1p).astype(cd)
            self.fb1p = _pad2(self.fb1, 1, self.E1p)
            self.fw2p = _pad2(self.fw2, self.E1p, self.Hp).astype(cd)
            self.fb2p = _pad2(self.fb2, 1, self.Hp)
            self.fw3p = _pad2(self.fw3.T, 1, self.Hp).astype(cd)      # (1, Hp) row

    # ---- prop path ---------------------------------------------------------
    def _prop(self, x, batch_idx, num_graphs):
        N, E = x.shape
        if batch_idx is None:
            batch_idx = jnp.zeros((N,), jnp.int32)
            num_graphs = 1
        B = int(num_graphs)

        tn = min(self.tile_n, _round_up(N, LANE))
        n_pad = _round_up(N, tn)
        grid = (n_pad // tn,)

        xp = jnp.pad(x, ((0, n_pad - N), (0, 0))).astype(self.compute_dtype)
        # pad batch_idx with out-of-range value B -> padded rows never match
        bidx = jnp.pad(batch_idx.astype(jnp.int32), (0, n_pad - N),
                       constant_values=B).reshape(1, n_pad)

        E1p, Hp, Op = self.E1p, self.Hp, self.Op
        it = self._itemsize
        vmem = (2 * tn * (E * it + 4)                                  # x + bidx tiles (dbl buf)
                + 2 * it * (E * E1p + E1p * Hp + Hp * Op)              # resident weights
                + 2 * 4 * (E1p + Hp)                                   # biases
                + 2 * 4 * B * Op + 4 * B * Op)                         # out + count scratch
        vmem = min(int(vmem) + (8 << 20), 96 << 20)

        kern = functools.partial(
            _prop_kernel,
            is_extensive=self.is_extensive,
            compute_dtype=self.compute_dtype,
            approx_recip=self.compute_dtype == jnp.bfloat16)

        resident = lambda i: (0, 0)
        out = pl.pallas_call(
            kern,
            out_shape=jax.ShapeDtypeStruct((B, Op), jnp.float32),
            grid_spec=pltpu.PrefetchScalarGridSpec(
                num_scalar_prefetch=0,
                grid=grid,
                in_specs=[
                    pl.BlockSpec((1, tn), lambda i: (0, i)),          # batch_idx tile
                    pl.BlockSpec((tn, E), lambda i: (i, 0)),          # x tile
                    pl.BlockSpec((E, E1p), resident),                 # w1
                    pl.BlockSpec((1, E1p), resident),                 # b1
                    pl.BlockSpec((E1p, Hp), resident),                # w2
                    pl.BlockSpec((1, Hp), resident),                  # b2
                    pl.BlockSpec((Hp, Op), resident),                 # w3
                ],
                out_specs=pl.BlockSpec((B, Op), resident),            # accumulator
                scratch_shapes=[pltpu.VMEM((B, Op), jnp.float32)],    # per-graph counts
            ),
            compiler_params=pltpu.CompilerParams(
                dimension_semantics=("arbitrary",),        # node axis = reduction
                vmem_limit_bytes=vmem),
        )(bidx, xp, self.w1p, self.b1p, self.w2p, self.b2p, self.w3p)
        return out[:, :self.out_size]

    # ---- direct force path --------------------------------------------------
    def _force(self, x, idx_s, idx_t, edge_vec_st):
        N, E = x.shape
        M = idx_s.shape[0]

        tm = min(self.tile_m, _round_up(M, LANE))
        m_pad = _round_up(M, tm)
        grid = (m_pad // tm,)

        # padded edges: index 0 with zero edge_vec -> contribute exactly zero
        pidx_s = jnp.pad(idx_s.astype(jnp.int32), (0, m_pad - M))
        pidx_t = jnp.pad(idx_t.astype(jnp.int32), (0, m_pad - M))
        evp = jnp.pad(edge_vec_st.astype(jnp.float32),
                      ((0, m_pad - M), (0, LANE - edge_vec_st.shape[1])))

        E1p, Hp = self.E1p, self.Hp
        it = self._itemsize
        vmem = (2 * N * E * 4                                          # resident x (f32)
                + 2 * tm * LANE * 4                                    # edge_vec tile (dbl buf)
                + 2 * it * (2 * E * E1p + E1p * Hp + Hp)               # resident weights
                + 2 * 4 * (E1p + Hp)                                   # biases
                + 2 * N * LANE * 4                                     # out accumulator
                + 2 * tm * E * 4 + tm * LANE * 4)                      # gather/scatter scratch
        vmem = min(int(vmem) + (8 << 20), 96 << 20)

        res = lambda m, *_: (0, 0)
        out = pl.pallas_call(
            functools.partial(_force_kernel, compute_dtype=self.compute_dtype),
            out_shape=jax.ShapeDtypeStruct((N, LANE), jnp.float32),
            grid_spec=pltpu.PrefetchScalarGridSpec(
                num_scalar_prefetch=2,                                 # idx_s, idx_t -> SMEM
                grid=grid,
                in_specs=[
                    pl.BlockSpec((N, E), res),                         # x (resident, f32)
                    pl.BlockSpec((tm, LANE), lambda m, *_: (m, 0)),    # edge vectors (lane-padded)
                    pl.BlockSpec((E, E1p), res),                       # fw1 (source half)
                    pl.BlockSpec((E, E1p), res),                       # fw1 (target half)
                    pl.BlockSpec((1, E1p), res),                       # fb1
                    pl.BlockSpec((E1p, Hp), res),                      # fw2
                    pl.BlockSpec((1, Hp), res),                        # fb2
                    pl.BlockSpec((1, Hp), res),                        # fw3 (row)
                ],
                out_specs=pl.BlockSpec((N, LANE), res),                # lane-dense accumulator
                scratch_shapes=[
                    pltpu.VMEM((tm, E), jnp.float32),                  # gathered x[idx_s]
                    pltpu.VMEM((tm, E), jnp.float32),                  # gathered x[idx_t]
                    pltpu.VMEM((tm, LANE), jnp.float32),               # force_st tile
                ],
            ),
            compiler_params=pltpu.CompilerParams(
                dimension_semantics=("arbitrary",),        # edge axis = scatter reduction
                vmem_limit_bytes=vmem),
        )(pidx_s, pidx_t, x.astype(jnp.float32), evp,
          self.fw1ap, self.fw1bp, self.fb1p, self.fw2p, self.fb2p, self.fw3p)
        return out[:N, :3]

    def __call__(self, x, batch_idx, idx_s, idx_t, edge_vec_st, pos, num_graphs):
        prop = self._prop(x, batch_idx, num_graphs)
        if not self.regress_forces:
            return prop
        if self.direct_forces:
            force_s = self._force(x, idx_s, idx_t, edge_vec_st)
            return prop, force_s
        # TODO(synk): autograd-based (non-direct) force regression (grads w.r.t. pos)
        raise NotImplementedError("autograd force path has no Pallas equivalent here")


# ---------------------------------------------------------------------------
# Pure-JAX reference for verification
# ---------------------------------------------------------------------------
def _reference(mod, x, batch_idx, idx_s, idx_t, edge_vec_st, B):
    h = jax.nn.silu(x @ mod.w1 + mod.b1)
    h = jax.nn.silu(h @ mod.w2 + mod.b2)
    p = h @ mod.w3
    seg = jax.ops.segment_sum(p, batch_idx, num_segments=B)
    if not mod.is_extensive:
        cnt = jax.ops.segment_sum(jnp.ones((x.shape[0], 1)), batch_idx, num_segments=B)
        seg = seg / jnp.maximum(cnt, 1.0)
    if not (mod.regress_forces and mod.direct_forces):
        return seg, None
    cat = jnp.concatenate([x[idx_s], x[idx_t]], axis=-1)
    h = jax.nn.silu(cat @ mod.fw1 + mod.fb1)
    h = jax.nn.silu(h @ mod.fw2 + mod.fb2)
    fm = h @ mod.fw3
    fst = fm * edge_vec_st
    fs = jax.ops.segment_sum(fst, idx_s, num_segments=x.shape[0])
    return seg, fs


# ---------------------------------------------------------------------------
if __name__ == "__main__":
    key = jax.random.PRNGKey(0)
    k_x, k_e, k_s, k_t, k_w = jax.random.split(key, 5)

    # small, but sized to exercise multiple grid steps (2 node tiles, 3 edge tiles)
    N, E, O, B, M = 200, 32, 4, 2, 300
    x = jax.random.normal(k_x, (N, E), jnp.float32)
    batch_idx = jnp.concatenate([jnp.zeros(N // 2, jnp.int32),
                                 jnp.ones(N - N // 2, jnp.int32)])
    idx_s = jax.random.randint(k_s, (M,), 0, N, dtype=jnp.int32)
    idx_t = jax.random.randint(k_t, (M,), 0, N, dtype=jnp.int32)
    edge_vec_st = jax.random.normal(k_e, (M, 3), jnp.float32)
    pos = jax.random.normal(key, (N, 3), jnp.float32)  # only used by autograd branch

    # 1) f32 MXU inputs, extensive (sum) reduction — tight check
    mod = LCAOOutPallas(E, O, is_extensive=True, regress_forces=True,
                        direct_forces=True, key=k_w,
                        compute_dtype=jnp.float32, tile_n=128, tile_m=128)
    prop, force_s = mod(x, batch_idx, idx_s, idx_t, edge_vec_st, pos, num_graphs=B)
    prop, force_s = jax.block_until_ready((prop, force_s))
    ref_prop, ref_force = _reference(mod, x, batch_idx, idx_s, idx_t, edge_vec_st, B)
    assert prop.shape == (B, O) and force_s.shape == (N, 3)
    assert jnp.allclose(prop, ref_prop, atol=1e-4, rtol=1e-4)
    assert jnp.allclose(force_s, ref_force, atol=1e-4, rtol=1e-4)

    # 2) bf16 MXU inputs (v6e/v7x fast path), intensive (mean) reduction — loose check
    mod_bf16 = LCAOOutPallas(E, O, is_extensive=False, regress_forces=True,
                             direct_forces=True, key=k_w,
                             compute_dtype=jnp.bfloat16, tile_n=128, tile_m=128)
    prop2, force2 = mod_bf16(x, batch_idx, idx_s, idx_t, edge_vec_st, pos, num_graphs=B)
    prop2, force2 = jax.block_until_ready((prop2, force2))
    ref_prop2, ref_force2 = _reference(mod_bf16, x, batch_idx, idx_s, idx_t,
                                       edge_vec_st, B)
    assert jnp.allclose(prop2, ref_prop2, atol=5e-2, rtol=5e-2)
    assert jnp.allclose(force2, ref_force2, atol=5e-2, rtol=5e-2)

    print("KERNEL_OK")
</pallas_src>

<mosaic_0001>
module attributes {stable_mosaic.version = 11 : i64} {
  func.func @_prop_kernel(%arg0: i32, %arg1: memref<1x128xi32, #tpu.memory_space<vmem>>, %arg2: memref<128x32xf32, #tpu.memory_space<vmem>>, %arg3: memref<32x128xf32, #tpu.memory_space<vmem>>, %arg4: memref<1x128xf32, #tpu.memory_space<vmem>>, %arg5: memref<128x128xf32, #tpu.memory_space<vmem>>, %arg6: memref<1x128xf32, #tpu.memory_space<vmem>>, %arg7: memref<128x128xf32, #tpu.memory_space<vmem>>, %arg8: memref<2x128xf32, #tpu.memory_space<vmem>>, %arg9: memref<2x128xf32, #tpu.memory_space<vmem>>) attributes {dimension_semantics = [#tpu.dimension_semantics<arbitrary>], iteration_bounds = array<i64: 2>, scalar_prefetch = 0 : i64, scratch_operands = 1 : i64, tpu.core_type = #tpu.core_type<tc>, window_params = [{transform_indices = @transform_0, window_bounds = array<i64: 1, 128>}, {transform_indices = @transform_1, window_bounds = array<i64: 128, 32>}, {pipeline_mode = #tpu.pipeline_mode<synchronous>, transform_indices = @transform_2, window_bounds = array<i64: 32, 128>}, {pipeline_mode = #tpu.pipeline_mode<synchronous>, transform_indices = @transform_3, window_bounds = array<i64: 1, 128>}, {pipeline_mode = #tpu.pipeline_mode<synchronous>, transform_indices = @transform_4, window_bounds = array<i64: 128, 128>}, {pipeline_mode = #tpu.pipeline_mode<synchronous>, transform_indices = @transform_5, window_bounds = array<i64: 1, 128>}, {pipeline_mode = #tpu.pipeline_mode<synchronous>, transform_indices = @transform_6, window_bounds = array<i64: 128, 128>}, {pipeline_mode = #tpu.pipeline_mode<synchronous>, transform_indices = @transform_7, window_bounds = array<i64: 2, 128>}]} {
    %c0_i32 = arith.constant 0 : i32
    %0 = arith.cmpi eq, %arg0, %c0_i32 : i32
    %1 = arith.extui %0 : i1 to i32
    %c0_i32_0 = arith.constant 0 : i32
    %2 = arith.cmpi ne, %1, %c0_i32_0 : i32
    scf.if %2 {
      %cst_23 = arith.constant 0.000000e+00 : f32
      %38 = vector.broadcast %cst_23 : f32 to vector<2x128xf32>
      %c0_24 = arith.constant 0 : index
      %c0_25 = arith.constant 0 : index
      %39 = vector.load %arg8[%c0_24, %c0_25] : memref<2x128xf32, #tpu.memory_space<vmem>>, vector<2x128xf32>
      tpu.vector_store %arg8[%c0_24, %c0_25], %38 {strides = array<i32>} : memref<2x128xf32, #tpu.memory_space<vmem>>, vector<2x128xf32>,
      %cst_26 = arith.constant 0.000000e+00 : f32
      %40 = vector.broadcast %cst_26 : f32 to vector<2x128xf32>
      %c0_27 = arith.constant 0 : index
      %c0_28 = arith.constant 0 : index
      %41 = vector.load %arg9[%c0_27, %c0_28] : memref<2x128xf32, #tpu.memory_space<vmem>>, vector<2x128xf32>
      tpu.vector_store %arg9[%c0_27, %c0_28], %40 {strides = array<i32>} : memref<2x128xf32, #tpu.memory_space<vmem>>, vector<2x128xf32>,
    } else {
    }
    %c0 = arith.constant 0 : index
    %c0_1 = arith.constant 0 : index
    %3 = vector.load %arg2[%c0, %c0_1] : memref<128x32xf32, #tpu.memory_space<vmem>>, vector<128x32xf32>
    %c0_2 = arith.constant 0 : index
    %c0_3 = arith.constant 0 : index
    %4 = vector.load %arg3[%c0_2, %c0_3] : memref<32x128xf32, #tpu.memory_space<vmem>>, vector<32x128xf32>
    %cst = arith.constant dense<0.000000e+00> : vector<128x128xf32>
    %5 = tpu.matmul %3, %4, %cst {dimension_numbers = #tpu.dot_dimension_numbers<[1], [0], [0], [1], [0, 0, 1, 1], [], []>} : vector<128x32xf32>, vector<32x128xf32>, vector<128x128xf32> -> vector<128x128xf32>
    %c0_4 = arith.constant 0 : index
    %c0_5 = arith.constant 0 : index
    %6 = vector.load %arg4[%c0_4, %c0_5] : memref<1x128xf32, #tpu.memory_space<vmem>>, vector<1x128xf32>
    %7 = vector.broadcast %6 : vector<1x128xf32> to vector<128x128xf32>
    %8 = arith.addf %5, %7 : vector<128x128xf32>
    %9 = arith.negf %8 : vector<128x128xf32>
    %10 = math.exp %9 : vector<128x128xf32>
    %cst_6 = arith.constant 1.000000e+00 : f32
    %11 = vector.broadcast %cst_6 : f32 to vector<128x128xf32>
    %12 = arith.addf %11, %10 : vector<128x128xf32>
    %13 = arith.divf %11, %12 : vector<128x128xf32>
    %14 = arith.mulf %8, %13 : vector<128x128xf32>
    %c0_7 = arith.constant 0 : index
    %c0_8 = arith.constant 0 : index
    %15 = vector.load %arg5[%c0_7, %c0_8] : memref<128x128xf32, #tpu.memory_space<vmem>>, vector<128x128xf32>
    %cst_9 = arith.constant dense<0.000000e+00> : vector<128x128xf32>
    %16 = tpu.matmul %14, %15, %cst_9 {dimension_numbers = #tpu.dot_dimension_numbers<[1], [0], [0], [1], [0, 0, 1, 1], [], []>} : vector<128x128xf32>, vector<128x128xf32>, vector<128x128xf32> -> vector<128x128xf32>
    %c0_10 = arith.constant 0 : index
    %c0_11 = arith.constant 0 : index
    %17 = vector.load %arg6[%c0_10, %c0_11] : memref<1x128xf32, #tpu.memory_space<vmem>>, vector<1x128xf32>
    %18 = vector.broadcast %17 : vector<1x128xf32> to vector<128x128xf32>
    %19 = arith.addf %16, %18 : vector<128x128xf32>
    %20 = arith.negf %19 : vector<128x128xf32>
    %21 = math.exp %20 : vector<128x128xf32>
    %cst_12 = arith.constant 1.000000e+00 : f32
    %22 = vector.broadcast %cst_12 : f32 to vector<128x128xf32>
    %23 = arith.addf %22, %21 : vector<128x128xf32>
    %24 = arith.divf %22, %23 : vector<128x128xf32>
    %25 = arith.mulf %19, %24 : vector<128x128xf32>
    %c0_13 = arith.constant 0 : index
    %c0_14 = arith.constant 0 : index
    %26 = vector.load %arg7[%c0_13, %c0_14] : memref<128x128xf32, #tpu.memory_space<vmem>>, vector<128x128xf32>
    %cst_15 = arith.constant dense<0.000000e+00> : vector<128x128xf32>
    %27 = tpu.matmul %25, %26, %cst_15 {dimension_numbers = #tpu.dot_dimension_numbers<[1], [0], [0], [1], [0, 0, 1, 1], [], []>} : vector<128x128xf32>, vector<128x128xf32>, vector<128x128xf32> -> vector<128x128xf32>
    %28 = tpu.iota {dimensions = array<i32: 0>} : vector<2x128xi32>
    %c0_16 = arith.constant 0 : index
    %c0_17 = arith.constant 0 : index
    %29 = vector.load %arg1[%c0_16, %c0_17] : memref<1x128xi32, #tpu.memory_space<vmem>>, vector<1x128xi32>
    %30 = vector.broadcast %29 : vector<1x128xi32> to vector<2x128xi32>
    %31 = arith.cmpi eq, %28, %30 : vector<2x128xi32>
    %32 = arith.extui %31 : vector<2x128xi1> to vector<2x128xi32>
    %33 = arith.sitofp %32 : vector<2x128xi32> to vector<2x128xf32>
    %c0_18 = arith.constant 0 : index
    %c0_19 = arith.constant 0 : index
    %34 = vector.load %arg8[%c0_18, %c0_19] : memref<2x128xf32, #tpu.memory_space<vmem>>, vector<2x128xf32>
    %cst_20 = arith.constant dense<0.000000e+00> : vector<2x128xf32>
    %35 = tpu.matmul %33, %27, %cst_20 {dimension_numbers = #tpu.dot_dimension_numbers<[1], [0], [0], [1], [0, 0, 1, 1], [], []>} : vector<2x128xf32>, vector<128x128xf32>, vector<2x128xf32> -> vector<2x128xf32>
    %36 = arith.addf %34, %35 : vector<2x128xf32>
    %c0_21 = arith.constant 0 : index
    %c0_22 = arith.constant 0 : index
    %37 = vector.load %arg8[%c0_21, %c0_22] : memref<2x128xf32, #tpu.memory_space<vmem>>, vector<2x128xf32>
    tpu.vector_store %arg8[%c0_21, %c0_22], %36 {strides = array<i32>} : memref<2x128xf32, #tpu.memory_space<vmem>>, vector<2x128xf32>,
    return
  }
  func.func @transform_0(%arg0: i32) -> (i32, i32) {
    %c0_i32 = arith.constant 0 : i32
    %c0_i32_0 = arith.constant 0 : i32
    return %c0_i32, %arg0 : i32, i32
  }
  func.func @transform_1(%arg0: i32) -> (i32, i32) {
    %c0_i32 = arith.constant 0 : i32
    %c0_i32_0 = arith.constant 0 : i32
    return %arg0, %c0_i32 : i32, i32
  }
  func.func @transform_2(%arg0: i32) -> (i32, i32) {
    %c0_i32 = arith.constant 0 : i32
    %c0_i32_0 = arith.constant 0 : i32
    %c0_i32_1 = arith.constant 0 : i32
    return %c0_i32, %c0_i32_0 : i32, i32
  }
  func.func @transform_3(%arg0: i32) -> (i32, i32) {
    %c0_i32 = arith.constant 0 : i32
    %c0_i32_0 = arith.constant 0 : i32
    %c0_i32_1 = arith.constant 0 : i32
    return %c0_i32, %c0_i32_0 : i32, i32
  }
  func.func @transform_4(%arg0: i32) -> (i32, i32) {
    %c0_i32 = arith.constant 0 : i32
    %c0_i32_0 = arith.constant 0 : i32
    %c0_i32_1 = arith.constant 0 : i32
    return %c0_i32, %c0_i32_0 : i32, i32
  }
  func.func @transform_5(%arg0: i32) -> (i32, i32) {
    %c0_i32 = arith.constant 0 : i32
    %c0_i32_0 = arith.constant 0 : i32
    %c0_i32_1 = arith.constant 0 : i32
    return %c0_i32, %c0_i32_0 : i32, i32
  }
  func.func @transform_6(%arg0: i32) -> (i32, i32) {
    %c0_i32 = arith.constant 0 : i32
    %c0_i32_0 = arith.constant 0 : i32
    %c0_i32_1 = arith.constant 0 : i32
    return %c0_i32, %c0_i32_0 : i32, i32
  }
  func.func @transform_7(%arg0: i32) -> (i32, i32) {
    %c0_i32 = arith.constant 0 : i32
    %c0_i32_0 = arith.constant 0 : i32
    %c0_i32_1 = arith.constant 0 : i32
    return %c0_i32, %c0_i32_0 : i32, i32
  }
}

</mosaic_0001>

<llo_original>
// kernel: tpu_custom_call.1
$region0: #{tpu_custom_call.1}
  #allocation0 [shape = 'u32[]', space=smem, size = 0x4, offset = 0x4, fixed_abs, tag = 'smem constant byte address 0x4 - core index']
  #allocation1 [shape = 'u32[144,128]{1,0:T(1,128)}', space=vmem, size = 0x12000, scoped, tag = 'internal scratch']
  #allocation2 [shape = 'f32[2,128]{1,0:T(2,128)}', space=vmem, size = 0x400, scoped, tag = 'scratch operand']
  %s0 = inlined_call_operand.vmem [shape: s32[1,256], index: 0, kind: input, shape index: {}]
  %s1 = inlined_call_operand.vmem [shape: f32[256,32], index: 1, kind: input, shape index: {}]
  %s2 = inlined_call_operand.vmem [shape: f32[32,128], index: 2, kind: input, shape index: {}]
  %s3 = inlined_call_operand.vmem [shape: f32[1,128], index: 3, kind: input, shape index: {}]
  %s4 = inlined_call_operand.vmem [shape: f32[128,128], index: 4, kind: input, shape index: {}]
  %s5 = inlined_call_operand.vmem [shape: f32[1,128], index: 5, kind: input, shape index: {}]
  %s6 = inlined_call_operand.vmem [shape: f32[128,128], index: 6, kind: input, shape index: {}]
  %s7 = inlined_call_operand.hbm [shape: f32[2,128], index: 7, kind: output, shape index: {}]
  %s8 = sld [smem:[#allocation0]]
  $region65: #{tpu_custom_call.1} parent=0
    _
  %s10 = ssub.s32 1, %s8
  %s11 = scalar_select 0, %s10, %s8
  $region1: #{tpu_custom_call.1} parent=0
    #allocation3 [shape = 'u8[1024]{0}', space=vmem, size = 0x400, scoped, tag = 'output window, operand 0, single buffered']
    #allocation4 [shape = 's32[2]{0}', space=sflag, size = 0x8, scoped, tag = 'scoped memory for tpu_custom_call.1']
    %12 = vsyncpa [#allocation4], 0
    loop: start=0, step=1, limit=4
    $region2: #{tpu_custom_call.1} parent=1 // loop_pre_header
      _
    $region3: #{tpu_custom_call.1} parent=1 // loop_header
      %s14 = sphi 0, %s18
      %p15 = scmp.ge.s32.totalorder %s14, 4
      %s24 = sphi 0, %s26
      %s27 = sphi 0, %s24
      %s28 = sphi 0, %s27
      %s44 = sphi 0, %s28
      %s50 = sphi 0, %s52
      %s53 = sphi 0, %s50
      %s54 = sphi 0, %s53
      %s70 = sphi 0, %s54
      %s74 = sphi 0, %s74
      %s76 = sphi 0, %s74
      %s77 = sphi 0, %s76
      %s91 = sphi 0, %s77
      %s95 = sphi 0, %s95
      %s97 = sphi 0, %s95
      %s98 = sphi 0, %s97
      %s112 = sphi 0, %s98
      %s116 = sphi 0, %s116
      %s118 = sphi 0, %s116
      %s119 = sphi 0, %s118
      %s133 = sphi 0, %s119
      %s137 = sphi 0, %s137
      %s139 = sphi 0, %s137
      %s140 = sphi 0, %s139
      %s154 = sphi 0, %s140
      %s158 = sphi 0, %s158
      %s160 = sphi 0, %s158
      %s161 = sphi 0, %s160
      %s175 = sphi 0, %s161
      %s179 = sphi 0, %s179
      %s181 = sphi 0, %s179
      %s182 = sphi 0, %s181
      %s196 = sphi 0, %s182
    $region4: #{tpu_custom_call.1} parent=1 // loop_header_branch
      %17 = sbr.rel (%p15) target = $region8
    $region5: #{tpu_custom_call.1} parent=1 // loop_body
      %s19 = ssub.s32 %s14, 1
      %s20 = ssub.s32 %s14, 2
      %s21 = sadd.s32 %s14, 1
      %s22 = ssub.s32 %s14, %s21
      %p23 = scmp.eq.s32.totalorder %s22, 0
      %s25 = sadd.s32 %s24, 1
      %s26 = scalar_select %p23, %s24, %s25
      %p29 = pneg %p23
      %p30 = scmp.eq.s32.totalorder %s14, 1
      %p31 = por %p29, %p30
      %p32 = scmp.ne.s32.totalorder %s24, %s27
      %p33 = scmp.eq.s32.totalorder %s14, 0
      %p34 = por %p32, %p33
      %p35 = scmp.ne.s32.totalorder %s24, %s27
      %p36 = scmp.eq.s32.totalorder %s19, 1
      %p37 = por %p35, %p36
      %p38 = scmp.ne.s32.totalorder %s27, %s28
      %p39 = scmp.eq.s32.totalorder %s19, 0
      %p40 = por %p38, %p39
      %p41 = scmp.ne.s32.totalorder %s27, %s28
      %p42 = scmp.eq.s32.totalorder %s20, 1
      %p43 = por %p41, %p42
      %p45 = scmp.ne.s32.totalorder %s28, %s44
      %p46 = scmp.eq.s32.totalorder %s20, 0
      %p47 = por %p45, %p46
      %s48 = ssub.s32 %s14, %s21
      %p49 = scmp.eq.s32.totalorder %s48, 0
      %s51 = sadd.s32 %s50, 1
      %s52 = scalar_select %p49, %s50, %s51
      %p55 = pneg %p49
      %p56 = scmp.eq.s32.totalorder %s14, 1
      %p57 = por %p55, %p56
      %p58 = scmp.ne.s32.totalorder %s50, %s53
      %p59 = scmp.eq.s32.totalorder %s14, 0
      %p60 = por %p58, %p59
      %p61 = scmp.ne.s32.totalorder %s50, %s53
      %p62 = scmp.eq.s32.totalorder %s19, 1
      %p63 = por %p61, %p62
      %p64 = scmp.ne.s32.totalorder %s53, %s54
      %p65 = scmp.eq.s32.totalorder %s19, 0
      %p66 = por %p64, %p65
      %p67 = scmp.ne.s32.totalorder %s53, %s54
      %p68 = scmp.eq.s32.totalorder %s20, 1
      %p69 = por %p67, %p68
      %p71 = scmp.ne.s32.totalorder %s54, %s70
      %p72 = scmp.eq.s32.totalorder %s20, 0
      %p73 = por %p71, %p72
      %s75 = sadd.s32 %s74, 1
      %p78 = scmp.eq.s32.totalorder %s14, 1
      %p79 = scmp.ne.s32.totalorder %s74, %s76
      %p80 = scmp.eq.s32.totalorder %s14, 0
      %p81 = por %p79, %p80
      %p82 = scmp.ne.s32.totalorder %s74, %s76
      %p83 = scmp.eq.s32.totalorder %s19, 1
      %p84 = por %p82, %p83
      %p85 = scmp.ne.s32.totalorder %s76, %s77
      %p86 = scmp.eq.s32.totalorder %s19, 0
      %p87 = por %p85, %p86
      %p88 = scmp.ne.s32.totalorder %s76, %s77
      %p89 = scmp.eq.s32.totalorder %s20, 1
      %p90 = por %p88, %p89
      %p92 = scmp.ne.s32.totalorder %s77, %s91
      %p93 = scmp.eq.s32.totalorder %s20, 0
      %p94 = por %p92, %p93
      %s96 = sadd.s32 %s95, 1
      %p99 = scmp.eq.s32.totalorder %s14, 1
      %p100 = scmp.ne.s32.totalorder %s95, %s97
      %p101 = scmp.eq.s32.totalorder %s14, 0
      %p102 = por %p100, %p101
      %p103 = scmp.ne.s32.totalorder %s95, %s97
      %p104 = scmp.eq.s32.totalorder %s19, 1
      %p105 = por %p103, %p104
      %p106 = scmp.ne.s32.totalorder %s97, %s98
      %p107 = scmp.eq.s32.totalorder %s19, 0
      %p108 = por %p106, %p107
      %p109 = scmp.ne.s32.totalorder %s97, %s98
      %p110 = scmp.eq.s32.totalorder %s20, 1
      %p111 = por %p109, %p110
      %p113 = scmp.ne.s32.totalorder %s98, %s112
      %p114 = scmp.eq.s32.totalorder %s20, 0
      %p115 = por %p113, %p114
      %s117 = sadd.s32 %s116, 1
      %p120 = scmp.eq.s32.totalorder %s14, 1
      %p121 = scmp.ne.s32.totalorder %s116, %s118
      %p122 = scmp.eq.s32.totalorder %s14, 0
      %p123 = por %p121, %p122
      %p124 = scmp.ne.s32.totalorder %s116, %s118
      %p125 = scmp.eq.s32.totalorder %s19, 1
      %p126 = por %p124, %p125
      %p127 = scmp.ne.s32.totalorder %s118, %s119
      %p128 = scmp.eq.s32.totalorder %s19, 0
      %p129 = por %p127, %p128
      %p130 = scmp.ne.s32.totalorder %s118, %s119
      %p131 = scmp.eq.s32.totalorder %s20, 1
      %p132 = por %p130, %p131
      %p134 = scmp.ne.s32.totalorder %s119, %s133
      %p135 = scmp.eq.s32.totalorder %s20, 0
      %p136 = por %p134, %p135
      %s138 = sadd.s32 %s137, 1
      %p141 = scmp.eq.s32.totalorder %s14, 1
      %p142 = scmp.ne.s32.totalorder %s137, %s139
      %p143 = scmp.eq.s32.totalorder %s14, 0
      %p144 = por %p142, %p143
      %p145 = scmp.ne.s32.totalorder %s137, %s139
      %p146 = scmp.eq.s32.totalorder %s19, 1
      %p147 = por %p145, %p146
      %p148 = scmp.ne.s32.totalorder %s139, %s140
      %p149 = scmp.eq.s32.totalorder %s19, 0
      %p150 = por %p148, %p149
      %p151 = scmp.ne.s32.totalorder %s139, %s140
      %p152 = scmp.eq.s32.totalorder %s20, 1
      %p153 = por %p151, %p152
      %p155 = scmp.ne.s32.totalorder %s140, %s154
      %p156 = scmp.eq.s32.totalorder %s20, 0
      %p157 = por %p155, %p156
      %s159 = sadd.s32 %s158, 1
      %p162 = scmp.eq.s32.totalorder %s14, 1
      %p163 = scmp.ne.s32.totalorder %s158, %s160
      %p164 = scmp.eq.s32.totalorder %s14, 0
      %p165 = por %p163, %p164
      %p166 = scmp.ne.s32.totalorder %s158, %s160
      %p167 = scmp.eq.s32.totalorder %s19, 1
      %p168 = por %p166, %p167
      %p169 = scmp.ne.s32.totalorder %s160, %s161
      %p170 = scmp.eq.s32.totalorder %s19, 0
      %p171 = por %p169, %p170
      %p172 = scmp.ne.s32.totalorder %s160, %s161
      %p173 = scmp.eq.s32.totalorder %s20, 1
      %p174 = por %p172, %p173
      %p176 = scmp.ne.s32.totalorder %s161, %s175
      %p177 = scmp.eq.s32.totalorder %s20, 0
      %p178 = por %p176, %p177
      %s180 = sadd.s32 %s179, 1
      %p183 = scmp.eq.s32.totalorder %s14, 1
      %p184 = scmp.ne.s32.totalorder %s179, %s181
      %p185 = scmp.eq.s32.totalorder %s14, 0
      %p186 = por %p184, %p185
      %p187 = scmp.ne.s32.totalorder %s179, %s181
      %p188 = scmp.eq.s32.totalorder %s19, 1
      %p189 = por %p187, %p188
      %p190 = scmp.ne.s32.totalorder %s181, %s182
      %p191 = scmp.eq.s32.totalorder %s19, 0
      %p192 = por %p190, %p191
      %p193 = scmp.ne.s32.totalorder %s181, %s182
      %p194 = scmp.eq.s32.totalorder %s20, 1
      %p195 = por %p193, %p194
      %p197 = scmp.ne.s32.totalorder %s182, %s196
      %p198 = scmp.eq.s32.totalorder %s20, 0
      %p199 = por %p197, %p198
      %p200 = scmp.le.s32.totalorder 1, %s14
      %p201 = scmp.lt.s32.totalorder %s14, 3
      %p202 = pnand %p200, %p201
      %p203 = pneg %p202
      // Predicated region
      $region9: #{tpu_custom_call.1} parent=5 // pred_check
        _
      $region10: #{tpu_custom_call.1} parent=5 // pred_check_branch
        %205 = sbr.rel (%p202) target = $region12
      $region11: #{tpu_custom_call.1} parent=5 // pred_region
        %s206 = ssub.s32 %s14, 1
        // Predicated region
        $region13: #{tpu_custom_call.1} parent=11 // pred_check
          %p207 = pneg %p87
        $region14: #{tpu_custom_call.1} parent=11 // pred_check_branch
          %209 = sbr.rel (%p207) target = $region16
        $region15: #{tpu_custom_call.1} parent=11 // pred_region
          _
        $region16: #{tpu_custom_call.1} parent=11 // pred_fallthru
          _
        // Predicated region
        $region17: #{tpu_custom_call.1} parent=11 // pred_check
          %p210 = pneg %p108
        $region18: #{tpu_custom_call.1} parent=11 // pred_check_branch
          %212 = sbr.rel (%p210) target = $region20
        $region19: #{tpu_custom_call.1} parent=11 // pred_region
          _
        $region20: #{tpu_custom_call.1} parent=11 // pred_fallthru
          _
        // Predicated region
        $region21: #{tpu_custom_call.1} parent=11 // pred_check
          %p213 = pneg %p129
        $region22: #{tpu_custom_call.1} parent=11 // pred_check_branch
          %215 = sbr.rel (%p213) target = $region24
        $region23: #{tpu_custom_call.1} parent=11 // pred_region
          _
        $region24: #{tpu_custom_call.1} parent=11 // pred_fallthru
          _
        // Predicated region
        $region25: #{tpu_custom_call.1} parent=11 // pred_check
          %p216 = pneg %p150
        $region26: #{tpu_custom_call.1} parent=11 // pred_check_branch
          %218 = sbr.rel (%p216) target = $region28
        $region27: #{tpu_custom_call.1} parent=11 // pred_region
          _
        $region28: #{tpu_custom_call.1} parent=11 // pred_fallthru
          _
        // Predicated region
        $region29: #{tpu_custom_call.1} parent=11 // pred_check
          %p219 = pneg %p171
        $region30: #{tpu_custom_call.1} parent=11 // pred_check_branch
          %221 = sbr.rel (%p219) target = $region32
        $region31: #{tpu_custom_call.1} parent=11 // pred_region
          _
        $region32: #{tpu_custom_call.1} parent=11 // pred_fallthru
          _
      $region12: #{tpu_custom_call.1} parent=5 // pred_fallthru
        _
      %p222 = scmp.lt.s32.totalorder %s14, 2
      // Predicated region
      $region33: #{tpu_custom_call.1} parent=5 // pred_check
        %p223 = pneg %p222
      $region34: #{tpu_custom_call.1} parent=5 // pred_check_branch
        %225 = sbr.rel (%p223) target = $region36
      $region35: #{tpu_custom_call.1} parent=5 // pred_region
        // Predicated region
        $region37: #{tpu_custom_call.1} parent=35 // pred_check
          %p226 = pneg %p34
        $region38: #{tpu_custom_call.1} parent=35 // pred_check_branch
          %228 = sbr.rel (%p226) target = $region40
        $region39: #{tpu_custom_call.1} parent=35 // pred_region
          %p229 = scmp.lt.s32.totalorder %s14, 1
          %s230 = scalar_select %p229, %s14, 1
          %s231 = scalar_lea.vmem %s0, %s230
        $region40: #{tpu_custom_call.1} parent=35 // pred_fallthru
          _
        // Predicated region
        $region41: #{tpu_custom_call.1} parent=35 // pred_check
          %p232 = pneg %p60
        $region42: #{tpu_custom_call.1} parent=35 // pred_check_branch
          %234 = sbr.rel (%p232) target = $region44
        $region43: #{tpu_custom_call.1} parent=35 // pred_region
          %s235 = smul.u32 16, %s14
          %p236 = scmp.lt.s32.totalorder %s235, 31
          %s237 = scalar_select %p236, %s235, 31
          %s238 = smul.addr %s237, 8
          %s239 = scalar_lea.vmem %s1, %s238
          %s240 = smul.u32 16, %s14
        $region44: #{tpu_custom_call.1} parent=35 // pred_fallthru
          _
      $region36: #{tpu_custom_call.1} parent=5 // pred_fallthru
        _
      %p241 = scmp.le.s32.totalorder 1, %s14
      %p242 = scmp.lt.s32.totalorder %s14, 3
      %p243 = pnand %p241, %p242
      %p244 = pneg %p243
      // Predicated region
      $region45: #{tpu_custom_call.1} parent=5 // pred_check
        _
      $region46: #{tpu_custom_call.1} parent=5 // pred_check_branch
        %246 = sbr.rel (%p243) target = $region48
      $region47: #{tpu_custom_call.1} parent=5 // pred_region
        %s247 = ssub.s32 %s14, 1
        %p248 = scmp.lt.s32.totalorder %s19, 1
        %s249 = scalar_select %p248, %s19, 1
        %s250 = scalar_lea.vmem %s0, %s249
        %p251 = pneg %p40
        %p252 = pneg %p37
        %s253 = smul.u32 16, %s19
        %p254 = scmp.lt.s32.totalorder %s253, 31
        %s255 = scalar_select %p254, %s253, 31
        %s256 = smul.addr %s255, 8
        %s257 = scalar_lea.vmem %s1, %s256
        %p258 = pneg %p66
        %p259 = pneg %p63
        %p260 = pneg %p87
        %p261 = pneg %p84
        %p262 = pneg %p108
        %p263 = pneg %p105
        %p264 = pneg %p129
        %p265 = pneg %p126
        %p266 = pneg %p150
        %p267 = pneg %p147
        %p268 = pneg %p171
        %p269 = pneg %p168
        %p270 = pneg %p192
        %p271 = pneg %p189
        %p272 = scmp.lt.s32.totalorder %s19, 1
        %s273 = scalar_select %p272, %s19, 1
        %s274 = scalar_lea.vmem %s0, %s273
        %s275 = smul.u32 16, %s19
        %p276 = scmp.lt.s32.totalorder %s275, 31
        %s277 = scalar_select %p276, %s275, 31
        %s278 = smul.addr %s277, 8
        %s279 = scalar_lea.vmem %s1, %s278
        %s280 = smul.u32 16, %s19
        %p281 = scmp.eq.s32.totalorder %s19, 0
        // Predicated region
        $region49: #{tpu_custom_call.1} parent=47 // pred_check
          %p282 = pneg %p281
        $region50: #{tpu_custom_call.1} parent=47 // pred_check_branch
          %284 = sbr.rel (%p282) target = $region52
        $region51: #{tpu_custom_call.1} parent=47 // pred_region
          %285 = vst [vmem:[#allocation3] sm:$0x3] 0.0
          %286 = vst [vmem:[#allocation2] sm:$0x3] 0.0
        $region52: #{tpu_custom_call.1} parent=47 // pred_fallthru
          _
        %v287 = vld [vmem:[%s279] sm:$0xff]
        %v288 = vld [vmem:[%s279 + $0x8] sm:$0xff]
        %v289 = vld [vmem:[%s279 + $0x10] sm:$0xff]
        %v290 = vld [vmem:[%s279 + $0x18] sm:$0xff]
        %v291 = vld [vmem:[%s279 + $0x20] sm:$0xff]
        %v292 = vld [vmem:[%s279 + $0x28] sm:$0xff]
        %v293 = vld [vmem:[%s279 + $0x30] sm:$0xff]
        %v294 = vld [vmem:[%s279 + $0x38] sm:$0xff]
        %v295 = vld [vmem:[%s279 + $0x40] sm:$0xff]
        %v296 = vld [vmem:[%s279 + $0x48] sm:$0xff]
        %v297 = vld [vmem:[%s279 + $0x50] sm:$0xff]
        %v298 = vld [vmem:[%s279 + $0x58] sm:$0xff]
        %v299 = vld [vmem:[%s279 + $0x60] sm:$0xff]
        %v300 = vld [vmem:[%s279 + $0x68] sm:$0xff]
        %v301 = vld [vmem:[%s279 + $0x70] sm:$0xff]
        %v302 = vld [vmem:[%s279 + $0x78] sm:$0xff]
        %v303 = vld [vmem:[%s2] sm:$0xff]
        %v304 = vld [vmem:[%s2 + $0x8] sm:$0xff]
        %v305 = vld [vmem:[%s2 + $0x10] sm:$0xff]
        %v306 = vld [vmem:[%s2 + $0x18] sm:$0xff]
        %v307 = vld [vmem:[%s3] sm:$0x1]
        %v309 = vlaneseq
        %v310 = vshrl.u32 %v309, 7
        %v311 = vsub.s32 0, %v310
        %v312 = vrot.slane %v307, %v311
        %vm314 = vcmask 261120
        %v316 = vsel %vm314, %v287, 0
        %v319 = vsel %vm314, %v288, 0
        %v322 = vsel %vm314, %v289, 0
        %v325 = vsel %vm314, %v290, 0
        %v328 = vsel %vm314, %v291, 0
        %v331 = vsel %vm314, %v292, 0
        %v334 = vsel %vm314, %v293, 0
        %v337 = vsel %vm314, %v294, 0
        %v340 = vsel %vm314, %v295, 0
        %v343 = vsel %vm314, %v296, 0
        %v346 = vsel %vm314, %v297, 0
        %v349 = vsel %vm314, %v298, 0
        %v352 = vsel %vm314, %v299, 0
        %v355 = vsel %vm314, %v300, 0
        %v358 = vsel %vm314, %v301, 0
        %v361 = vsel %vm314, %v302, 0
        %363 = vmatprep.subr.mxu0 0.0
        %364 = vmatpush1.msra.mxu0 %v303
        %365 = vmatprep.subr.mxu0 0.0
        %366 = vmatpush1.msra.mxu0 %v304
        %367 = vmatprep.subr.mxu0 0.0
        %368 = vmatpush1.msra.mxu0 %v305
        %369 = vmatprep.subr.mxu0 0.0
        %370 = vmatpush1.msra.mxu0 %v306
        %371 = vmatprep.subr.mxu0 0.0
        %372 = vmatpush1.msra.mxu0 0.0
        %373 = vmatprep.subr.mxu0 0.0
        %374 = vmatpush1.msra.mxu0 0.0
        %375 = vmatprep.subr.mxu0 0.0
        %376 = vmatpush1.msra.mxu0 0.0
        %377 = vmatprep.subr.mxu0 0.0
        %378 = vmatpush1.msra.mxu0 0.0
        %379 = vmatprep.subr.mxu0 0.0
        %380 = vmatpush1.msra.mxu0 0.0
        %381 = vmatprep.subr.mxu0 0.0
        %382 = vmatpush1.msra.mxu0 0.0
        %383 = vmatprep.subr.mxu0 0.0
        %384 = vmatpush1.msra.mxu0 0.0
        %385 = vmatprep.subr.mxu0 0.0
        %386 = vmatpush1.msra.mxu0 0.0
        %387 = vmatprep.subr.mxu0 0.0
        %388 = vmatpush1.msra.mxu0 0.0
        %389 = vmatprep.subr.mxu0 0.0
        %390 = vmatpush1.msra.mxu0 0.0
        %391 = vmatprep.subr.mxu0 0.0
        %392 = vmatpush1.msra.mxu0 0.0
        %393 = vmatprep.subr.mxu0 0.0
        %394 = vmatpush1.msra.mxu0 0.0
        %395 = vmatprep.subr.mxu0 0.0
        %396 = vmatpush1.msra.mxu0 0.0
        %397 = vmatprep.subr.mxu0 0.0
        %398 = vmatpush1.msra.mxu0 0.0
        %399 = vmatprep.subr.mxu0 0.0
        %400 = vmatpush1.msra.mxu0 0.0
        %401 = vmatprep.subr.mxu0 0.0
        %402 = vmatpush1.msra.mxu0 0.0
        %403 = vmatprep.subr.mxu0 0.0
        %404 = vmatpush1.msra.mxu0 0.0
        %405 = vmatprep.subr.mxu0 0.0
        %406 = vmatpush1.msra.mxu0 0.0
        %407 = vmatprep.subr.mxu0 0.0
        %408 = vmatpush1.msra.mxu0 0.0
        %409 = vmatprep.subr.mxu0 0.0
        %410 = vmatpush1.msra.mxu0 0.0
        %411 = vmatprep.subr.mxu0 0.0
        %412 = vmatpush1.msra.mxu0 0.0
        %413 = vmatprep.subr.mxu0 0.0
        %414 = vmatpush1.msra.mxu0 0.0
        %415 = vmatprep.subr.mxu0 0.0
        %416 = vmatpush1.msra.mxu0 0.0
        %417 = vmatprep.subr.mxu0 0.0
        %418 = vmatpush1.msra.mxu0 0.0
        %419 = vmatprep.subr.mxu0 0.0
        %420 = vmatpush1.msra.mxu0 0.0
        %421 = vmatprep.subr.mxu0 0.0
        %422 = vmatpush1.msra.mxu0 0.0
        %423 = vmatprep.subr.mxu0 0.0
        %424 = vmatpush1.msra.mxu0 0.0
        %425 = vmatprep.subr.mxu0 0.0
        %426 = vmatpush1.msra.mxu0 0.0
        %427 = vmatprep.mubr.f32.mxu0 0.0
        %428 = vmatmul.mubr.f32.gmra.mrb[0].mxu0 %v316
        %v429 = vpop.f32.mrb[0].mxu0
        %v430 = vadd.f32 %v312, %v429
        %v431 = vpop.f32.mrb[0].mxu0
        %432 = vmatprep.mubr.f32.mxu0 0.0
        %433 = vmatmul.mubr.f32.gmra.mrb[0].mxu0 %v319
        %v434 = vpop.f32.mrb[0].mxu0
        %v435 = vadd.f32 %v312, %v434
        %v436 = vpop.f32.mrb[0].mxu0
        %437 = vmatprep.mubr.f32.mxu0 0.0
        %438 = vmatmul.mubr.f32.gmra.mrb[0].mxu0 %v322
        %v439 = vpop.f32.mrb[0].mxu0
        %v440 = vadd.f32 %v312, %v439
        %v441 = vpop.f32.mrb[0].mxu0
        %442 = vmatprep.mubr.f32.mxu0 0.0
        %443 = vmatmul.mubr.f32.gmra.mrb[0].mxu0 %v325
        %v444 = vpop.f32.mrb[0].mxu0
        %v445 = vadd.f32 %v312, %v444
        %v446 = vpop.f32.mrb[0].mxu0
        %447 = vmatprep.mubr.f32.mxu0 0.0
        %448 = vmatmul.mubr.f32.gmra.mrb[0].mxu0 %v328
        %v449 = vpop.f32.mrb[0].mxu0
        %v450 = vadd.f32 %v312, %v449
        %v451 = vpop.f32.mrb[0].mxu0
        %452 = vmatprep.mubr.f32.mxu0 0.0
        %453 = vmatmul.mubr.f32.gmra.mrb[0].mxu0 %v331
        %v454 = vpop.f32.mrb[0].mxu0
        %v455 = vadd.f32 %v312, %v454
        %v456 = vpop.f32.mrb[0].mxu0
        %457 = vmatprep.mubr.f32.mxu0 0.0
        %458 = vmatmul.mubr.f32.gmra.mrb[0].mxu0 %v334
        %v459 = vpop.f32.mrb[0].mxu0
        %v460 = vadd.f32 %v312, %v459
        %v461 = vpop.f32.mrb[0].mxu0
        %462 = vmatprep.mubr.f32.mxu0 0.0
        %463 = vmatmul.mubr.f32.gmra.mrb[0].mxu0 %v337
        %v464 = vpop.f32.mrb[0].mxu0
        %v465 = vadd.f32 %v312, %v464
        %v466 = vpop.f32.mrb[0].mxu0
        %467 = vmatprep.mubr.f32.mxu0 0.0
        %468 = vmatmul.mubr.f32.gmra.mrb[0].mxu0 %v340
        %v469 = vpop.f32.mrb[0].mxu0
        %v470 = vadd.f32 %v312, %v469
        %v471 = vpop.f32.mrb[0].mxu0
        %472 = vmatprep.mubr.f32.mxu0 0.0
        %473 = vmatmul.mubr.f32.gmra.mrb[0].mxu0 %v343
        %v474 = vpop.f32.mrb[0].mxu0
        %v475 = vadd.f32 %v312, %v474
        %v476 = vpop.f32.mrb[0].mxu0
        %477 = vmatprep.mubr.f32.mxu0 0.0
        %478 = vmatmul.mubr.f32.gmra.mrb[0].mxu0 %v346
        %v479 = vpop.f32.mrb[0].mxu0
        %v480 = vadd.f32 %v312, %v479
        %v481 = vpop.f32.mrb[0].mxu0
        %482 = vmatprep.mubr.f32.mxu0 0.0
        %483 = vmatmul.mubr.f32.gmra.mrb[0].mxu0 %v349
        %v484 = vpop.f32.mrb[0].mxu0
        %v485 = vadd.f32 %v312, %v484
        %v486 = vpop.f32.mrb[0].mxu0
        %487 = vmatprep.mubr.f32.mxu0 0.0
        %488 = vmatmul.mubr.f32.gmra.mrb[0].mxu0 %v352
        %v489 = vpop.f32.mrb[0].mxu0
        %v490 = vadd.f32 %v312, %v489
        %v491 = vpop.f32.mrb[0].mxu0
        %492 = vmatprep.mubr.f32.mxu0 0.0
        %493 = vmatmul.mubr.f32.gmra.mrb[0].mxu0 %v355
        %v494 = vpop.f32.mrb[0].mxu0
        %v495 = vadd.f32 %v312, %v494
        %v496 = vpop.f32.mrb[0].mxu0
        %497 = vmatprep.mubr.f32.mxu0 0.0
        %498 = vmatmul.mubr.f32.gmra.mrb[0].mxu0 %v358
        %v499 = vpop.f32.mrb[0].mxu0
        %v500 = vadd.f32 %v312, %v499
        %v501 = vpop.f32.mrb[0].mxu0
        %502 = vmatprep.mubr.f32.mxu0 0.0
        %503 = vmatmul.mubr.f32.gmra.mrb[0].mxu0 %v361
        %v504 = vpop.f32.mrb[0].mxu0
        %v505 = vadd.f32 %v312, %v504
        %v506 = vpop.f32.mrb[0].mxu0
        %507 = vdwg.mxu0
        %v508 = vxor.u32 %v430, 2147483648
        %v509 = vxor.u32 %v435, 2147483648
        %v510 = vxor.u32 %v440, 2147483648
        %v511 = vxor.u32 %v445, 2147483648
        %v512 = vxor.u32 %v450, 2147483648
        %v513 = vxor.u32 %v455, 2147483648
        %v514 = vxor.u32 %v460, 2147483648
        %v515 = vxor.u32 %v465, 2147483648
        %v516 = vxor.u32 %v470, 2147483648
        %v517 = vxor.u32 %v475, 2147483648
        %v518 = vxor.u32 %v480, 2147483648
        %v519 = vxor.u32 %v485, 2147483648
        %v520 = vxor.u32 %v490, 2147483648
        %v521 = vxor.u32 %v495, 2147483648
        %v522 = vxor.u32 %v500, 2147483648
        %v523 = vxor.u32 %v505, 2147483648
        %v524 = vmul.f32 %v508, 1.442695
        %v525 = vpow.pop %v524
        %v526 = vmul.f32 %v509, 1.442695
        %v527 = vpow.pop %v526
        %v528 = vmul.f32 %v510, 1.442695
        %v529 = vpow.pop %v528
        %v530 = vmul.f32 %v511, 1.442695
        %v531 = vpow.pop %v530
        %v532 = vmul.f32 %v512, 1.442695
        %v533 = vpow.pop %v532
        %v534 = vmul.f32 %v513, 1.442695
        %v535 = vpow.pop %v534
        %v536 = vmul.f32 %v514, 1.442695
        %v537 = vpow.pop %v536
        %v538 = vmul.f32 %v515, 1.442695
        %v539 = vpow.pop %v538
        %v540 = vmul.f32 %v516, 1.442695
        %v541 = vpow.pop %v540
        %v542 = vmul.f32 %v517, 1.442695
        %v543 = vpow.pop %v542
        %v544 = vmul.f32 %v518, 1.442695
        %v545 = vpow.pop %v544
        %v546 = vmul.f32 %v519, 1.442695
        %v547 = vpow.pop %v546
        %v548 = vmul.f32 %v520, 1.442695
        %v549 = vpow.pop %v548
        %v550 = vmul.f32 %v521, 1.442695
        %v551 = vpow.pop %v550
        %v552 = vmul.f32 %v522, 1.442695
        %v553 = vpow.pop %v552
        %v554 = vmul.f32 %v523, 1.442695
        %v555 = vpow.pop %v554
        %v556 = vadd.f32 %v525, 1.0
        %v557 = vadd.f32 %v527, 1.0
        %v558 = vadd.f32 %v529, 1.0
        %v559 = vadd.f32 %v531, 1.0
        %v560 = vadd.f32 %v533, 1.0
        %v561 = vadd.f32 %v535, 1.0
        %v562 = vadd.f32 %v537, 1.0
        %v563 = vadd.f32 %v539, 1.0
        %v564 = vadd.f32 %v541, 1.0
        %v565 = vadd.f32 %v543, 1.0
        %v566 = vadd.f32 %v545, 1.0
        %v567 = vadd.f32 %v547, 1.0
        %v568 = vadd.f32 %v549, 1.0
        %v569 = vadd.f32 %v551, 1.0
        %v570 = vadd.f32 %v553, 1.0
        %v571 = vadd.f32 %v555, 1.0
        %v572 = vrcp.pop %v556
        %v573 = vmul.f32 1.0, %v572
        %v574 = vrcp.pop %v557
        %v575 = vmul.f32 1.0, %v574
        %v576 = vrcp.pop %v558
        %v577 = vmul.f32 1.0, %v576
        %v578 = vrcp.pop %v559
        %v579 = vmul.f32 1.0, %v578
        %v580 = vrcp.pop %v560
        %v581 = vmul.f32 1.0, %v580
        %v582 = vrcp.pop %v561
        %v583 = vmul.f32 1.0, %v582
        %v584 = vrcp.pop %v562
        %v585 = vmul.f32 1.0, %v584
        %v586 = vrcp.pop %v563
        %v587 = vmul.f32 1.0, %v586
        %v588 = vrcp.pop %v564
        %v589 = vmul.f32 1.0, %v588
        %v590 = vrcp.pop %v565
        %v591 = vmul.f32 1.0, %v590
        %v592 = vrcp.pop %v566
        %v593 = vmul.f32 1.0, %v592
        %v594 = vrcp.pop %v567
        %v595 = vmul.f32 1.0, %v594
        %v596 = vrcp.pop %v568
        %v597 = vmul.f32 1.0, %v596
        %v598 = vrcp.pop %v569
        %v599 = vmul.f32 1.0, %v598
        %v600 = vrcp.pop %v570
        %v601 = vmul.f32 1.0, %v600
        %v602 = vrcp.pop %v571
        %v603 = vmul.f32 1.0, %v602
        %v604 = vmul.f32 %v430, %v573
        %v605 = vmul.f32 %v435, %v575
        %v606 = vmul.f32 %v440, %v577
        %v607 = vmul.f32 %v445, %v579
        %v608 = vmul.f32 %v450, %v581
        %v609 = vmul.f32 %v455, %v583
        %v610 = vmul.f32 %v460, %v585
        %v611 = vmul.f32 %v465, %v587
        %v612 = vmul.f32 %v470, %v589
        %v613 = vmul.f32 %v475, %v591
        %v614 = vmul.f32 %v480, %v593
        %v615 = vmul.f32 %v485, %v595
        %v616 = vmul.f32 %v490, %v597
        %v617 = vmul.f32 %v495, %v599
        %v618 = vmul.f32 %v500, %v601
        %v619 = vmul.f32 %v505, %v603
        %v620 = vld [vmem:[%s4] sm:$0xff]
        %v621 = vld [vmem:[%s4 + $0x8] sm:$0xff]
        %v622 = vld [vmem:[%s4 + $0x10] sm:$0xff]
        %v623 = vld [vmem:[%s4 + $0x18] sm:$0xff]
        %v624 = vld [vmem:[%s4 + $0x20] sm:$0xff]
        %v625 = vld [vmem:[%s4 + $0x28] sm:$0xff]
        %v626 = vld [vmem:[%s4 + $0x30] sm:$0xff]
        %v627 = vld [vmem:[%s4 + $0x38] sm:$0xff]
        %v628 = vld [vmem:[%s4 + $0x40] sm:$0xff]
        %v629 = vld [vmem:[%s4 + $0x48] sm:$0xff]
        %v630 = vld [vmem:[%s4 + $0x50] sm:$0xff]
        %v631 = vld [vmem:[%s4 + $0x58] sm:$0xff]
        %v632 = vld [vmem:[%s4 + $0x60] sm:$0xff]
        %v633 = vld [vmem:[%s4 + $0x68] sm:$0xff]
        %v634 = vld [vmem:[%s4 + $0x70] sm:$0xff]
        %v635 = vld [vmem:[%s4 + $0x78] sm:$0xff]
        %v636 = vld [vmem:[%s5] sm:$0x1]
        %v638 = vlaneseq
        %v639 = vshrl.u32 %v638, 7
        %v640 = vsub.s32 0, %v639
        %v641 = vrot.slane %v636, %v640
        %643 = vmatprep.subr.mxu0 0.0
        %644 = vmatpush1.msra.mxu0 %v620
        %645 = vmatprep.subr.mxu0 0.0
        %646 = vmatpush1.msra.mxu0 %v621
        %647 = vmatprep.subr.mxu0 0.0
        %648 = vmatpush1.msra.mxu0 %v622
        %649 = vmatprep.subr.mxu0 0.0
        %650 = vmatpush1.msra.mxu0 %v623
        %651 = vmatprep.subr.mxu0 0.0
        %652 = vmatpush1.msra.mxu0 %v624
        %653 = vmatprep.subr.mxu0 0.0
        %654 = vmatpush1.msra.mxu0 %v625
        %655 = vmatprep.subr.mxu0 0.0
        %656 = vmatpush1.msra.mxu0 %v626
        %657 = vmatprep.subr.mxu0 0.0
        %658 = vmatpush1.msra.mxu0 %v627
        %659 = vmatprep.subr.mxu0 0.0
        %660 = vmatpush1.msra.mxu0 %v628
        %661 = vmatprep.subr.mxu0 0.0
        %662 = vmatpush1.msra.mxu0 %v629
        %663 = vmatprep.subr.mxu0 0.0
        %664 = vmatpush1.msra.mxu0 %v630
        %665 = vmatprep.subr.mxu0 0.0
        %666 = vmatpush1.msra.mxu0 %v631
        %667 = vmatprep.subr.mxu0 0.0
        %668 = vmatpush1.msra.mxu0 %v632
        %669 = vmatprep.subr.mxu0 0.0
        %670 = vmatpush1.msra.mxu0 %v633
        %671 = vmatprep.subr.mxu0 0.0
        %672 = vmatpush1.msra.mxu0 %v634
        %673 = vmatprep.subr.mxu0 0.0
        %674 = vmatpush1.msra.mxu0 %v635
        %675 = vmatprep.subr.mxu0 0.0
        %676 = vmatpush1.msra.mxu0 0.0
        %677 = vmatprep.subr.mxu0 0.0
        %678 = vmatpush1.msra.mxu0 0.0
        %679 = vmatprep.subr.mxu0 0.0
        %680 = vmatpush1.msra.mxu0 0.0
        %681 = vmatprep.subr.mxu0 0.0
        %682 = vmatpush1.msra.mxu0 0.0
        %683 = vmatprep.subr.mxu0 0.0
        %684 = vmatpush1.msra.mxu0 0.0
        %685 = vmatprep.subr.mxu0 0.0
        %686 = vmatpush1.msra.mxu0 0.0
        %687 = vmatprep.subr.mxu0 0.0
        %688 = vmatpush1.msra.mxu0 0.0
        %689 = vmatprep.subr.mxu0 0.0
        %690 = vmatpush1.msra.mxu0 0.0
        %691 = vmatprep.subr.mxu0 0.0
        %692 = vmatpush1.msra.mxu0 0.0
        %693 = vmatprep.subr.mxu0 0.0
        %694 = vmatpush1.msra.mxu0 0.0
        %695 = vmatprep.subr.mxu0 0.0
        %696 = vmatpush1.msra.mxu0 0.0
        %697 = vmatprep.subr.mxu0 0.0
        %698 = vmatpush1.msra.mxu0 0.0
        %699 = vmatprep.subr.mxu0 0.0
        %700 = vmatpush1.msra.mxu0 0.0
        %701 = vmatprep.subr.mxu0 0.0
        %702 = vmatpush1.msra.mxu0 0.0
        %703 = vmatprep.subr.mxu0 0.0
        %704 = vmatpush1.msra.mxu0 0.0
        %705 = vmatprep.subr.mxu0 0.0
        %706 = vmatpush1.msra.mxu0 0.0
        %707 = vmatprep.mubr.f32.mxu0 0.0
        %708 = vmatmul.mubr.f32.gmra.mrb[0].mxu0 %v604
        %v709 = vpop.f32.mrb[0].mxu0
        %v710 = vadd.f32 %v641, %v709
        %v711 = vpop.f32.mrb[0].mxu0
        %712 = vmatprep.mubr.f32.mxu0 0.0
        %713 = vmatmul.mubr.f32.gmra.mrb[0].mxu0 %v605
        %v714 = vpop.f32.mrb[0].mxu0
        %v715 = vadd.f32 %v641, %v714
        %v716 = vpop.f32.mrb[0].mxu0
        %717 = vmatprep.mubr.f32.mxu0 0.0
        %718 = vmatmul.mubr.f32.gmra.mrb[0].mxu0 %v606
        %v719 = vpop.f32.mrb[0].mxu0
        %v720 = vadd.f32 %v641, %v719
        %v721 = vpop.f32.mrb[0].mxu0
        %722 = vmatprep.mubr.f32.mxu0 0.0
        %723 = vmatmul.mubr.f32.gmra.mrb[0].mxu0 %v607
        %v724 = vpop.f32.mrb[0].mxu0
        %v725 = vadd.f32 %v641, %v724
        %v726 = vpop.f32.mrb[0].mxu0
        %727 = vmatprep.mubr.f32.mxu0 0.0
        %728 = vmatmul.mubr.f32.gmra.mrb[0].mxu0 %v608
        %v729 = vpop.f32.mrb[0].mxu0
        %v730 = vadd.f32 %v641, %v729
        %v731 = vpop.f32.mrb[0].mxu0
        %732 = vmatprep.mubr.f32.mxu0 0.0
        %733 = vmatmul.mubr.f32.gmra.mrb[0].mxu0 %v609
        %v734 = vpop.f32.mrb[0].mxu0
        %v735 = vadd.f32 %v641, %v734
        %v736 = vpop.f32.mrb[0].mxu0
        %737 = vmatprep.mubr.f32.mxu0 0.0
        %738 = vmatmul.mubr.f32.gmra.mrb[0].mxu0 %v610
        %v739 = vpop.f32.mrb[0].mxu0
        %v740 = vadd.f32 %v641, %v739
        %v741 = vpop.f32.mrb[0].mxu0
        %742 = vmatprep.mubr.f32.mxu0 0.0
        %743 = vmatmul.mubr.f32.gmra.mrb[0].mxu0 %v611
        %v744 = vpop.f32.mrb[0].mxu0
        %v745 = vadd.f32 %v641, %v744
        %v746 = vpop.f32.mrb[0].mxu0
        %747 = vmatprep.mubr.f32.mxu0 0.0
        %748 = vmatmul.mubr.f32.gmra.mrb[0].mxu0 %v612
        %v749 = vpop.f32.mrb[0].mxu0
        %v750 = vadd.f32 %v641, %v749
        %v751 = vpop.f32.mrb[0].mxu0
        %752 = vmatprep.mubr.f32.mxu0 0.0
        %753 = vmatmul.mubr.f32.gmra.mrb[0].mxu0 %v613
        %v754 = vpop.f32.mrb[0].mxu0
        %v755 = vadd.f32 %v641, %v754
        %v756 = vpop.f32.mrb[0].mxu0
        %757 = vmatprep.mubr.f32.mxu0 0.0
        %758 = vmatmul.mubr.f32.gmra.mrb[0].mxu0 %v614
        %v759 = vpop.f32.mrb[0].mxu0
        %v760 = vadd.f32 %v641, %v759
        %v761 = vpop.f32.mrb[0].mxu0
        %762 = vmatprep.mubr.f32.mxu0 0.0
        %763 = vmatmul.mubr.f32.gmra.mrb[0].mxu0 %v615
        %v764 = vpop.f32.mrb[0].mxu0
        %v765 = vadd.f32 %v641, %v764
        %v766 = vpop.f32.mrb[0].mxu0
        %767 = vmatprep.mubr.f32.mxu0 0.0
        %768 = vmatmul.mubr.f32.gmra.mrb[0].mxu0 %v616
        %v769 = vpop.f32.mrb[0].mxu0
        %v770 = vadd.f32 %v641, %v769
        %v771 = vpop.f32.mrb[0].mxu0
        %772 = vmatprep.mubr.f32.mxu0 0.0
        %773 = vmatmul.mubr.f32.gmra.mrb[0].mxu0 %v617
        %v774 = vpop.f32.mrb[0].mxu0
        %v775 = vadd.f32 %v641, %v774
        %v776 = vpop.f32.mrb[0].mxu0
        %777 = vmatprep.mubr.f32.mxu0 0.0
        %778 = vmatmul.mubr.f32.gmra.mrb[0].mxu0 %v618
        %v779 = vpop.f32.mrb[0].mxu0
        %v780 = vadd.f32 %v641, %v779
        %v781 = vpop.f32.mrb[0].mxu0
        %782 = vmatprep.mubr.f32.mxu0 0.0
        %783 = vmatmul.mubr.f32.gmra.mrb[0].mxu0 %v619
        %v784 = vpop.f32.mrb[0].mxu0
        %v785 = vadd.f32 %v641, %v784
        %v786 = vpop.f32.mrb[0].mxu0
        %787 = vdwg.mxu0
        %v788 = vxor.u32 %v710, 2147483648
        %v789 = vxor.u32 %v715, 2147483648
        %v790 = vxor.u32 %v720, 2147483648
        %v791 = vxor.u32 %v725, 2147483648
        %v792 = vxor.u32 %v730, 2147483648
        %v793 = vxor.u32 %v735, 2147483648
        %v794 = vxor.u32 %v740, 2147483648
        %v795 = vxor.u32 %v745, 2147483648
        %v796 = vxor.u32 %v750, 2147483648
        %v797 = vxor.u32 %v755, 2147483648
        %v798 = vxor.u32 %v760, 2147483648
        %v799 = vxor.u32 %v765, 2147483648
        %v800 = vxor.u32 %v770, 2147483648
        %v801 = vxor.u32 %v775, 2147483648
        %v802 = vxor.u32 %v780, 2147483648
        %v803 = vxor.u32 %v785, 2147483648
        %v804 = vmul.f32 %v788, 1.442695
        %v805 = vpow.pop %v804
        %v806 = vmul.f32 %v789, 1.442695
        %v807 = vpow.pop %v806
        %v808 = vmul.f32 %v790, 1.442695
        %v809 = vpow.pop %v808
        %v810 = vmul.f32 %v791, 1.442695
        %v811 = vpow.pop %v810
        %v812 = vmul.f32 %v792, 1.442695
        %v813 = vpow.pop %v812
        %v814 = vmul.f32 %v793, 1.442695
        %v815 = vpow.pop %v814
        %v816 = vmul.f32 %v794, 1.442695
        %v817 = vpow.pop %v816
        %v818 = vmul.f32 %v795, 1.442695
        %v819 = vpow.pop %v818
        %v820 = vmul.f32 %v796, 1.442695
        %v821 = vpow.pop %v820
        %v822 = vmul.f32 %v797, 1.442695
        %v823 = vpow.pop %v822
        %v824 = vmul.f32 %v798, 1.442695
        %v825 = vpow.pop %v824
        %v826 = vmul.f32 %v799, 1.442695
        %v827 = vpow.pop %v826
        %v828 = vmul.f32 %v800, 1.442695
        %v829 = vpow.pop %v828
        %v830 = vmul.f32 %v801, 1.442695
        %v831 = vpow.pop %v830
        %v832 = vmul.f32 %v802, 1.442695
        %v833 = vpow.pop %v832
        %v834 = vmul.f32 %v803, 1.442695
        %v835 = vpow.pop %v834
        %v836 = vadd.f32 %v805, 1.0
        %v837 = vadd.f32 %v807, 1.0
        %v838 = vadd.f32 %v809, 1.0
        %v839 = vadd.f32 %v811, 1.0
        %v840 = vadd.f32 %v813, 1.0
        %v841 = vadd.f32 %v815, 1.0
        %v842 = vadd.f32 %v817, 1.0
        %v843 = vadd.f32 %v819, 1.0
        %v844 = vadd.f32 %v821, 1.0
        %v845 = vadd.f32 %v823, 1.0
        %v846 = vadd.f32 %v825, 1.0
        %v847 = vadd.f32 %v827, 1.0
        %v848 = vadd.f32 %v829, 1.0
        %v849 = vadd.f32 %v831, 1.0
        %v850 = vadd.f32 %v833, 1.0
        %v851 = vadd.f32 %v835, 1.0
        %v852 = vrcp.pop %v836
        %v853 = vmul.f32 1.0, %v852
        %v854 = vrcp.pop %v837
        %v855 = vmul.f32 1.0, %v854
        %v856 = vrcp.pop %v838
        %v857 = vmul.f32 1.0, %v856
        %v858 = vrcp.pop %v839
        %v859 = vmul.f32 1.0, %v858
        %v860 = vrcp.pop %v840
        %v861 = vmul.f32 1.0, %v860
        %v862 = vrcp.pop %v841
        %v863 = vmul.f32 1.0, %v862
        %v864 = vrcp.pop %v842
        %v865 = vmul.f32 1.0, %v864
        %v866 = vrcp.pop %v843
        %v867 = vmul.f32 1.0, %v866
        %v868 = vrcp.pop %v844
        %v869 = vmul.f32 1.0, %v868
        %v870 = vrcp.pop %v845
        %v871 = vmul.f32 1.0, %v870
        %v872 = vrcp.pop %v846
        %v873 = vmul.f32 1.0, %v872
        %v874 = vrcp.pop %v847
        %v875 = vmul.f32 1.0, %v874
        %v876 = vrcp.pop %v848
        %v877 = vmul.f32 1.0, %v876
        %v878 = vrcp.pop %v849
        %v879 = vmul.f32 1.0, %v878
        %v880 = vrcp.pop %v850
        %v881 = vmul.f32 1.0, %v880
        %v882 = vrcp.pop %v851
        %v883 = vmul.f32 1.0, %v882
        %v884 = vmul.f32 %v710, %v853
        %v885 = vmul.f32 %v715, %v855
        %v886 = vmul.f32 %v720, %v857
        %v887 = vmul.f32 %v725, %v859
        %v888 = vmul.f32 %v730, %v861
        %v889 = vmul.f32 %v735, %v863
        %v890 = vmul.f32 %v740, %v865
        %v891 = vmul.f32 %v745, %v867
        %v892 = vmul.f32 %v750, %v869
        %v893 = vmul.f32 %v755, %v871
        %v894 = vmul.f32 %v760, %v873
        %v895 = vmul.f32 %v765, %v875
        %v896 = vmul.f32 %v770, %v877
        %v897 = vmul.f32 %v775, %v879
        %v898 = vmul.f32 %v780, %v881
        %v899 = vmul.f32 %v785, %v883
        %v900 = vld [vmem:[%s6] sm:$0xff]
        %v901 = vld [vmem:[%s6 + $0x8] sm:$0xff]
        %v902 = vld [vmem:[%s6 + $0x10] sm:$0xff]
        %v903 = vld [vmem:[%s6 + $0x18] sm:$0xff]
        %v904 = vld [vmem:[%s6 + $0x20] sm:$0xff]
        %v905 = vld [vmem:[%s6 + $0x28] sm:$0xff]
        %v906 = vld [vmem:[%s6 + $0x30] sm:$0xff]
        %v907 = vld [vmem:[%s6 + $0x38] sm:$0xff]
        %v908 = vld [vmem:[%s6 + $0x40] sm:$0xff]
        %v909 = vld [vmem:[%s6 + $0x48] sm:$0xff]
        %v910 = vld [vmem:[%s6 + $0x50] sm:$0xff]
        %v911 = vld [vmem:[%s6 + $0x58] sm:$0xff]
        %v912 = vld [vmem:[%s6 + $0x60] sm:$0xff]
        %v913 = vld [vmem:[%s6 + $0x68] sm:$0xff]
        %v914 = vld [vmem:[%s6 + $0x70] sm:$0xff]
        %v915 = vld [vmem:[%s6 + $0x78] sm:$0xff]
        %916 = vmatprep.subr.mxu0 0.0
        %917 = vmatpush1.msra.mxu0 %v900
        %918 = vmatprep.subr.mxu0 0.0
        %919 = vmatpush1.msra.mxu0 %v901
        %920 = vmatprep.subr.mxu0 0.0
        %921 = vmatpush1.msra.mxu0 %v902
        %922 = vmatprep.subr.mxu0 0.0
        %923 = vmatpush1.msra.mxu0 %v903
        %924 = vmatprep.subr.mxu0 0.0
        %925 = vmatpush1.msra.mxu0 %v904
        %926 = vmatprep.subr.mxu0 0.0
        %927 = vmatpush1.msra.mxu0 %v905
        %928 = vmatprep.subr.mxu0 0.0
        %929 = vmatpush1.msra.mxu0 %v906
        %930 = vmatprep.subr.mxu0 0.0
        %931 = vmatpush1.msra.mxu0 %v907
        %932 = vmatprep.subr.mxu0 0.0
        %933 = vmatpush1.msra.mxu0 %v908
        %934 = vmatprep.subr.mxu0 0.0
        %935 = vmatpush1.msra.mxu0 %v909
        %936 = vmatprep.subr.mxu0 0.0
        %937 = vmatpush1.msra.mxu0 %v910
        %938 = vmatprep.subr.mxu0 0.0
        %939 = vmatpush1.msra.mxu0 %v911
        %940 = vmatprep.subr.mxu0 0.0
        %941 = vmatpush1.msra.mxu0 %v912
        %942 = vmatprep.subr.mxu0 0.0
        %943 = vmatpush1.msra.mxu0 %v913
        %944 = vmatprep.subr.mxu0 0.0
        %945 = vmatpush1.msra.mxu0 %v914
        %946 = vmatprep.subr.mxu0 0.0
        %947 = vmatpush1.msra.mxu0 %v915
        %948 = vmatprep.subr.mxu0 0.0
        %949 = vmatpush1.msra.mxu0 0.0
        %950 = vmatprep.subr.mxu0 0.0
        %951 = vmatpush1.msra.mxu0 0.0
        %952 = vmatprep.subr.mxu0 0.0
        %953 = vmatpush1.msra.mxu0 0.0
        %954 = vmatprep.subr.mxu0 0.0
        %955 = vmatpush1.msra.mxu0 0.0
        %956 = vmatprep.subr.mxu0 0.0
        %957 = vmatpush1.msra.mxu0 0.0
        %958 = vmatprep.subr.mxu0 0.0
        %959 = vmatpush1.msra.mxu0 0.0
        %960 = vmatprep.subr.mxu0 0.0
        %961 = vmatpush1.msra.mxu0 0.0
        %962 = vmatprep.subr.mxu0 0.0
        %963 = vmatpush1.msra.mxu0 0.0
        %964 = vmatprep.subr.mxu0 0.0
        %965 = vmatpush1.msra.mxu0 0.0
        %966 = vmatprep.subr.mxu0 0.0
        %967 = vmatpush1.msra.mxu0 0.0
        %968 = vmatprep.subr.mxu0 0.0
        %969 = vmatpush1.msra.mxu0 0.0
        %970 = vmatprep.subr.mxu0 0.0
        %971 = vmatpush1.msra.mxu0 0.0
        %972 = vmatprep.subr.mxu0 0.0
        %973 = vmatpush1.msra.mxu0 0.0
        %974 = vmatprep.subr.mxu0 0.0
        %975 = vmatpush1.msra.mxu0 0.0
        %976 = vmatprep.subr.mxu0 0.0
        %977 = vmatpush1.msra.mxu0 0.0
        %978 = vmatprep.subr.mxu0 0.0
        %979 = vmatpush1.msra.mxu0 0.0
        %980 = vmatprep.mubr.f32.mxu0 0.0
        %981 = vmatmul.mubr.f32.gmra.mrb[0].mxu0 %v884
        %v982 = vpop.f32.mrb[0].mxu0
        %v983 = vadd.f32 0.0, %v982
        %v984 = vpop.f32.mrb[0].mxu0
        %985 = vmatprep.mubr.f32.mxu0 0.0
        %986 = vmatmul.mubr.f32.gmra.mrb[0].mxu0 %v885
        %v987 = vpop.f32.mrb[0].mxu0
        %v988 = vadd.f32 0.0, %v987
        %v989 = vpop.f32.mrb[0].mxu0
        %990 = vmatprep.mubr.f32.mxu0 0.0
        %991 = vmatmul.mubr.f32.gmra.mrb[0].mxu0 %v886
        %v992 = vpop.f32.mrb[0].mxu0
        %v993 = vadd.f32 0.0, %v992
        %v994 = vpop.f32.mrb[0].mxu0
        %995 = vmatprep.mubr.f32.mxu0 0.0
        %996 = vmatmul.mubr.f32.gmra.mrb[0].mxu0 %v887
        %v997 = vpop.f32.mrb[0].mxu0
        %v998 = vadd.f32 0.0, %v997
        %v999 = vpop.f32.mrb[0].mxu0
        %1000 = vmatprep.mubr.f32.mxu0 0.0
        %1001 = vmatmul.mubr.f32.gmra.mrb[0].mxu0 %v888
        %v1002 = vpop.f32.mrb[0].mxu0
        %v1003 = vadd.f32 0.0, %v1002
        %v1004 = vpop.f32.mrb[0].mxu0
        %1005 = vmatprep.mubr.f32.mxu0 0.0
        %1006 = vmatmul.mubr.f32.gmra.mrb[0].mxu0 %v889
        %v1007 = vpop.f32.mrb[0].mxu0
        %v1008 = vadd.f32 0.0, %v1007
        %v1009 = vpop.f32.mrb[0].mxu0
        %1010 = vmatprep.mubr.f32.mxu0 0.0
        %1011 = vmatmul.mubr.f32.gmra.mrb[0].mxu0 %v890
        %v1012 = vpop.f32.mrb[0].mxu0
        %v1013 = vadd.f32 0.0, %v1012
        %v1014 = vpop.f32.mrb[0].mxu0
        %1015 = vmatprep.mubr.f32.mxu0 0.0
        %1016 = vmatmul.mubr.f32.gmra.mrb[0].mxu0 %v891
        %v1017 = vpop.f32.mrb[0].mxu0
        %v1018 = vadd.f32 0.0, %v1017
        %v1019 = vpop.f32.mrb[0].mxu0
        %1020 = vmatprep.mubr.f32.mxu0 0.0
        %1021 = vmatmul.mubr.f32.gmra.mrb[0].mxu0 %v892
        %v1022 = vpop.f32.mrb[0].mxu0
        %v1023 = vadd.f32 0.0, %v1022
        %v1024 = vpop.f32.mrb[0].mxu0
        %1025 = vmatprep.mubr.f32.mxu0 0.0
        %1026 = vmatmul.mubr.f32.gmra.mrb[0].mxu0 %v893
        %v1027 = vpop.f32.mrb[0].mxu0
        %v1028 = vadd.f32 0.0, %v1027
        %v1029 = vpop.f32.mrb[0].mxu0
        %1030 = vmatprep.mubr.f32.mxu0 0.0
        %1031 = vmatmul.mubr.f32.gmra.mrb[0].mxu0 %v894
        %v1032 = vpop.f32.mrb[0].mxu0
        %v1033 = vadd.f32 0.0, %v1032
        %v1034 = vpop.f32.mrb[0].mxu0
        %1035 = vmatprep.mubr.f32.mxu0 0.0
        %1036 = vmatmul.mubr.f32.gmra.mrb[0].mxu0 %v895
        %v1037 = vpop.f32.mrb[0].mxu0
        %v1038 = vadd.f32 0.0, %v1037
        %v1039 = vpop.f32.mrb[0].mxu0
        %1040 = vmatprep.mubr.f32.mxu0 0.0
        %1041 = vmatmul.mubr.f32.gmra.mrb[0].mxu0 %v896
        %v1042 = vpop.f32.mrb[0].mxu0
        %v1043 = vadd.f32 0.0, %v1042
        %v1044 = vpop.f32.mrb[0].mxu0
        %1045 = vmatprep.mubr.f32.mxu0 0.0
        %1046 = vmatmul.mubr.f32.gmra.mrb[0].mxu0 %v897
        %v1047 = vpop.f32.mrb[0].mxu0
        %v1048 = vadd.f32 0.0, %v1047
        %v1049 = vpop.f32.mrb[0].mxu0
        %1050 = vmatprep.mubr.f32.mxu0 0.0
        %1051 = vmatmul.mubr.f32.gmra.mrb[0].mxu0 %v898
        %v1052 = vpop.f32.mrb[0].mxu0
        %v1053 = vadd.f32 0.0, %v1052
        %v1054 = vpop.f32.mrb[0].mxu0
        %1055 = vmatprep.mubr.f32.mxu0 0.0
        %1056 = vmatmul.mubr.f32.gmra.mrb[0].mxu0 %v899
        %v1057 = vpop.f32.mrb[0].mxu0
        %v1058 = vadd.f32 0.0, %v1057
        %v1059 = vpop.f32.mrb[0].mxu0
        %1060 = vdwg.mxu0
        %v1061 = vlaneseq
        %v1062 = vshrl.u32 %v1061, 7
        %v1063 = vld [vmem:[%s274] sm:$0x1]
        %v1064 = vlaneseq
        %v1065 = vshrl.u32 %v1064, 7
        %v1066 = vsub.s32 0, %v1065
        %v1067 = vrot.slane %v1063, %v1066
        %vm1068 = vcmp.eq.s32.totalorder %v1062, %v1067
        %v1069 = vsel %vm1068, 1, 0
        %v1070 = vcvt.s32.f32 %v1069
        %v1071 = vld [vmem:[#allocation3] sm:$0x3]
        %1072 = vmatprep.subr.mxu0 0.0
        %1073 = vmatpush1.msra.mxu0 %v983
        %1074 = vmatprep.subr.mxu0 0.0
        %1075 = vmatpush1.msra.mxu0 %v988
        %1076 = vmatprep.subr.mxu0 0.0
        %1077 = vmatpush1.msra.mxu0 %v993
        %1078 = vmatprep.subr.mxu0 0.0
        %1079 = vmatpush1.msra.mxu0 %v998
        %1080 = vmatprep.subr.mxu0 0.0
        %1081 = vmatpush1.msra.mxu0 %v1003
        %1082 = vmatprep.subr.mxu0 0.0
        %1083 = vmatpush1.msra.mxu0 %v1008
        %1084 = vmatprep.subr.mxu0 0.0
        %1085 = vmatpush1.msra.mxu0 %v1013
        %1086 = vmatprep.subr.mxu0 0.0
        %1087 = vmatpush1.msra.mxu0 %v1018
        %1088 = vmatprep.subr.mxu0 0.0
        %1089 = vmatpush1.msra.mxu0 %v1023
        %1090 = vmatprep.subr.mxu0 0.0
        %1091 = vmatpush1.msra.mxu0 %v1028
        %1092 = vmatprep.subr.mxu0 0.0
        %1093 = vmatpush1.msra.mxu0 %v1033
        %1094 = vmatprep.subr.mxu0 0.0
        %1095 = vmatpush1.msra.mxu0 %v1038
        %1096 = vmatprep.subr.mxu0 0.0
        %1097 = vmatpush1.msra.mxu0 %v1043
        %1098 = vmatprep.subr.mxu0 0.0
        %1099 = vmatpush1.msra.mxu0 %v1048
        %1100 = vmatprep.subr.mxu0 0.0
        %1101 = vmatpush1.msra.mxu0 %v1053
        %1102 = vmatprep.subr.mxu0 0.0
        %1103 = vmatpush1.msra.mxu0 %v1058
        %1104 = vmatprep.subr.mxu0 0.0
        %1105 = vmatpush1.msra.mxu0 0.0
        %1106 = vmatprep.subr.mxu0 0.0
        %1107 = vmatpush1.msra.mxu0 0.0
        %1108 = vmatprep.subr.mxu0 0.0
        %1109 = vmatpush1.msra.mxu0 0.0
        %1110 = vmatprep.subr.mxu0 0.0
        %1111 = vmatpush1.msra.mxu0 0.0
        %1112 = vmatprep.subr.mxu0 0.0
        %1113 = vmatpush1.msra.mxu0 0.0
        %1114 = vmatprep.subr.mxu0 0.0
        %1115 = vmatpush1.msra.mxu0 0.0
        %1116 = vmatprep.subr.mxu0 0.0
        %1117 = vmatpush1.msra.mxu0 0.0
        %1118 = vmatprep.subr.mxu0 0.0
        %1119 = vmatpush1.msra.mxu0 0.0
        %1120 = vmatprep.subr.mxu0 0.0
        %1121 = vmatpush1.msra.mxu0 0.0
        %1122 = vmatprep.subr.mxu0 0.0
        %1123 = vmatpush1.msra.mxu0 0.0
        %1124 = vmatprep.subr.mxu0 0.0
        %1125 = vmatpush1.msra.mxu0 0.0
        %1126 = vmatprep.subr.mxu0 0.0
        %1127 = vmatpush1.msra.mxu0 0.0
        %1128 = vmatprep.subr.mxu0 0.0
        %1129 = vmatpush1.msra.mxu0 0.0
        %1130 = vmatprep.subr.mxu0 0.0
        %1131 = vmatpush1.msra.mxu0 0.0
        %1132 = vmatprep.subr.mxu0 0.0
        %1133 = vmatpush1.msra.mxu0 0.0
        %1134 = vmatprep.subr.mxu0 0.0
        %1135 = vmatpush1.msra.mxu0 0.0
        %1136 = vmatprep.mubr.f32.mxu0 0.0
        %1137 = vmatmul.mubr.f32.gmra.mrb[0].mxu0 %v1070
        %v1138 = vpop.f32.mrb[0].mxu0
        %v1139 = vadd.f32 0.0, %v1138
        %v1140 = vpop.f32.mrb[0].mxu0
        %1141 = vdwg.mxu0
        %v1142 = vadd.f32 %v1071, %v1139
        %1143 = vst [vmem:[#allocation3] sm:$0x3] %v1142
        // Predicated region
        $region53: #{tpu_custom_call.1} parent=47 // pred_check
          %p1144 = pneg %p189
        $region54: #{tpu_custom_call.1} parent=47 // pred_check_branch
          %1146 = sbr.rel (%p1144) target = $region56
        $region55: #{tpu_custom_call.1} parent=47 // pred_region
          %s1148 = ssub.s32 32, 32
          %1149 = vsyncadd [#allocation4], %s1148
          %s1151 = sshll.u32 [#allocation3], 4
          %s1152 = int_to_ptr.vmem [resolvable:$true] %s1151
          %1154 = dma.vmem_to_hbm [thread:$0]  %s1152, 32, %s7, [#allocation4]
        $region56: #{tpu_custom_call.1} parent=47 // pred_fallthru
          _
        // Predicated region
        $region57: #{tpu_custom_call.1} parent=47 // pred_check
          %p1155 = pneg %p189
        $region58: #{tpu_custom_call.1} parent=47 // pred_check_branch
          %1157 = sbr.rel (%p1155) target = $region60
        $region59: #{tpu_custom_call.1} parent=47 // pred_region
          %1158 = dma.done [#allocation4], 32
        $region60: #{tpu_custom_call.1} parent=47 // pred_fallthru
          _
      $region48: #{tpu_custom_call.1} parent=5 // pred_fallthru
        _
      %p1159 = scmp.le.s32.totalorder 2, %s14
      // Predicated region
      $region61: #{tpu_custom_call.1} parent=5 // pred_check
        %p1160 = pneg %p1159
      $region62: #{tpu_custom_call.1} parent=5 // pred_check_branch
        %1162 = sbr.rel (%p1160) target = $region64
      $region63: #{tpu_custom_call.1} parent=5 // pred_region
        %s1163 = ssub.s32 %s14, 2
      $region64: #{tpu_custom_call.1} parent=5 // pred_fallthru
        _
    $region6: #{tpu_custom_call.1} parent=1 // loop_footer
      %s18 = sadd.s32 1, %s14
    $region7: #{tpu_custom_call.1} parent=1 // loop_footer_branch
      %13 = sbr.rel target = $region3
    $region8: #{tpu_custom_call.1} parent=1 // loop_exit
      _
    %1164 = vsyncpa [#allocation4], 1
    %s1165 = scalar_lea.sflag [#allocation4], 1
    %1166 = vsyncpa %s1165, 1

</llo_original>
